<compile_context>
chip_gen: v7x
topology: tpu7x:2x2x1
jax: 0.10.0
libtpu: 0.0.40
codegen_flags: <defaults>
</compile_context>

<pallas_src>
import jax
import jax.numpy as jnp
from jax.experimental import pallas as pl
from jax.experimental.pallas import tpu as pltpu

_LANES = 128
_MAX_BLOCK_ROWS = 2048   # 2048 x 128 f32 = 1 MiB per input per pipeline buffer
_NUM_CORE_SPLITS = 2     # leading "parallel" grid axis (v7x megacore)


def _make_recall_kernel(block_rows, steps, rows_total, need_mask):
    def kernel(x_ref, t_ref, out_ref, tp_acc, fn_acc):
        j = pl.program_id(0)   # core split ("parallel")
        k = pl.program_id(1)   # reduction steps within the split ("arbitrary")

        @pl.when(k == 0)
        def _():
            tp_acc[...] = jnp.zeros_like(tp_acc)
            fn_acc[...] = jnp.zeros_like(fn_acc)

        x = x_ref[...].astype(jnp.float32)
        t = t_ref[...].astype(jnp.float32)

        # round(clip(.,0,1)); jnp.round matches torch.round (half-to-even).
        tp_vals = jnp.round(jnp.clip(x * t, 0.0, 1.0))
        fn_vals = jnp.round(jnp.clip(t, 0.0, 1.0))

        if need_mask:
            # Mask rows past the true row count (partial / clamped blocks).
            base = (j * steps + k) * block_rows
            row_ids = jax.lax.broadcasted_iota(
                jnp.int32, (block_rows, _LANES), 0
            )
            valid = (base + row_ids) < rows_total
            tp_vals = jnp.where(valid, tp_vals, 0.0)
            fn_vals = jnp.where(valid, fn_vals, 0.0)

        # Lane-resident partial sums; only a sublane reduce here.
        tp_acc[...] += jnp.sum(tp_vals, axis=0, keepdims=True)
        fn_acc[...] += jnp.sum(fn_vals, axis=0, keepdims=True)

        @pl.when(k == steps - 1)
        def _():
            out_ref[0, 0, :] = tp_acc[0, :]
            out_ref[0, 1, :] = fn_acc[0, :]

    return kernel


def recall(inputs: jax.Array, targets: jax.Array,
           max_block_rows: int = _MAX_BLOCK_ROWS) -> jax.Array:
    """Pallas TPU implementation of the Recall module's forward pass."""
    x = jnp.reshape(inputs, (-1,))
    t = jnp.reshape(targets, (-1,))
    n = x.shape[0]
    if n == 0:
        return jnp.array(jnp.nan, dtype=jnp.float32)  # 0/0, matches torch

    # Only a tiny lane-alignment pad (< 128 elems); zeros add 0 to both sums.
    rows = (n + _LANES - 1) // _LANES
    n_aligned = rows * _LANES
    if n_aligned != n:
        x = jnp.pad(x, (0, n_aligned - n))
        t = jnp.pad(t, (0, n_aligned - n))
    x2 = x.reshape(rows, _LANES)
    t2 = t.reshape(rows, _LANES)

    # Block sizing: full array if it fits, else a sublane-aligned big block.
    if rows > max_block_rows:
        block_rows = max(8, (max_block_rows // 8) * 8)
    else:
        block_rows = rows
    num_blocks = -(-rows // block_rows)
    nsplit = _NUM_CORE_SPLITS if num_blocks >= _NUM_CORE_SPLITS else 1
    steps = -(-num_blocks // nsplit)
    need_mask = (nsplit * steps * block_rows) != rows

    kernel = _make_recall_kernel(block_rows, steps, rows, need_mask)

    def in_map(j, k):
        # Clamp so the DMA source block always starts in bounds; the row mask
        # in the kernel zeroes any logically out-of-range block.
        blk = jnp.minimum(j * steps + k, num_blocks - 1)
        return (blk, 0)

    partials = pl.pallas_call(
        kernel,
        out_shape=jax.ShapeDtypeStruct((nsplit, 2, _LANES), jnp.float32),
        grid_spec=pltpu.PrefetchScalarGridSpec(
            num_scalar_prefetch=0,
            grid=(nsplit, steps),
            in_specs=[
                pl.BlockSpec((block_rows, _LANES), in_map),
                pl.BlockSpec((block_rows, _LANES), in_map),
            ],
            out_specs=pl.BlockSpec((1, 2, _LANES), lambda j, k: (j, 0, 0)),
            scratch_shapes=[
                pltpu.VMEM((1, _LANES), jnp.float32),  # tp partial (lanes)
                pltpu.VMEM((1, _LANES), jnp.float32),  # fn partial (lanes)
            ],
        ),
        compiler_params=pltpu.CompilerParams(
            dimension_semantics=("parallel", "arbitrary"),
        ),
    )(x2, t2)

    tp = jnp.sum(partials[:, 0, :])
    fn = jnp.sum(partials[:, 1, :])
    # NOTE: fn == 0 gives inf/NaN, identical to the PyTorch module.
    return tp / fn


def _reference(inputs, targets):
    xf = jnp.reshape(inputs, (-1,)).astype(jnp.float32)
    tf = jnp.reshape(targets, (-1,)).astype(jnp.float32)
    tp = jnp.sum(jnp.round(jnp.clip(xf * tf, 0.0, 1.0)))
    fn = jnp.sum(jnp.round(jnp.clip(tf, 0.0, 1.0)))
    return tp / fn


if __name__ == "__main__":
    key = jax.random.PRNGKey(0)

    def make_case(key, shape):
        k1, k2 = jax.random.split(key)
        inp = jax.nn.sigmoid(jax.random.normal(k1, shape, dtype=jnp.float32))
        tgt = (jax.random.uniform(k2, shape) > 0.5).astype(jnp.float32)
        return inp, tgt

    k0, k1, k2 = jax.random.split(key, 3)

    # Case 1: lane-aligned, single block.
    a_in, a_tg = make_case(k0, (2, 4, 16, 16))
    r1 = jax.block_until_ready(recall(a_in, a_tg))
    assert jnp.allclose(r1, _reference(a_in, a_tg), rtol=1e-5, atol=1e-5), r1

    # Case 2: unaligned length (exercises the small lane pad).
    b_in, b_tg = make_case(k1, (3, 5, 7, 11))
    r2 = jax.block_until_ready(recall(b_in, b_tg))
    assert jnp.allclose(r2, _reference(b_in, b_tg), rtol=1e-5, atol=1e-5), r2

    # Case 3: force multi-block + core-split + mask/clamp path via a small
    # max_block_rows (same code path large feature maps take at 2048 rows).
    c_in, c_tg = make_case(k2, (2, 4, 16, 20))
    r3 = jax.block_until_ready(recall(c_in, c_tg, max_block_rows=8))
    assert jnp.allclose(r3, _reference(c_in, c_tg), rtol=1e-5, atol=1e-5), r3

    print("KERNEL_OK")
</pallas_src>

<mosaic_0001>
module attributes {stable_mosaic.version = 11 : i64} {
  func.func @kernel(%arg0: i32, %arg1: i32, %arg2: memref<16x128xf32, #tpu.memory_space<vmem>>, %arg3: memref<16x128xf32, #tpu.memory_space<vmem>>, %arg4: memref<1x2x128xf32, #tpu.memory_space<vmem>>, %arg5: memref<1x128xf32, #tpu.memory_space<vmem>>, %arg6: memref<1x128xf32, #tpu.memory_space<vmem>>) attributes {dimension_semantics = [#tpu.dimension_semantics<parallel>, #tpu.dimension_semantics<arbitrary>], iteration_bounds = array<i64: 1, 1>, scalar_prefetch = 0 : i64, scratch_operands = 2 : i64, tpu.core_type = #tpu.core_type<tc>, window_params = [{transform_indices = @transform_0, window_bounds = array<i64: 16, 128>}, {transform_indices = @transform_1, window_bounds = array<i64: 16, 128>}, {transform_indices = @transform_2, window_bounds = array<i64: 1, 2, 128>}]} {
    %c0_i32 = arith.constant 0 : i32
    %0 = arith.cmpi eq, %arg1, %c0_i32 : i32
    %1 = arith.extui %0 : i1 to i32
    %c0_i32_0 = arith.constant 0 : i32
    %2 = arith.cmpi ne, %1, %c0_i32_0 : i32
    scf.if %2 {
      %cst_19 = arith.constant 0.000000e+00 : f32
      %29 = vector.broadcast %cst_19 : f32 to vector<1x128xf32>
      %c0_20 = arith.constant 0 : index
      %c0_21 = arith.constant 0 : index
      %30 = vector.load %arg5[%c0_20, %c0_21] : memref<1x128xf32, #tpu.memory_space<vmem>>, vector<1x128xf32>
      tpu.vector_store %arg5[%c0_20, %c0_21], %29 {strides = array<i32>} : memref<1x128xf32, #tpu.memory_space<vmem>>, vector<1x128xf32>,
      %cst_22 = arith.constant 0.000000e+00 : f32
      %31 = vector.broadcast %cst_22 : f32 to vector<1x128xf32>
      %c0_23 = arith.constant 0 : index
      %c0_24 = arith.constant 0 : index
      %32 = vector.load %arg6[%c0_23, %c0_24] : memref<1x128xf32, #tpu.memory_space<vmem>>, vector<1x128xf32>
      tpu.vector_store %arg6[%c0_23, %c0_24], %31 {strides = array<i32>} : memref<1x128xf32, #tpu.memory_space<vmem>>, vector<1x128xf32>,
    } else {
    }
    %c0 = arith.constant 0 : index
    %c0_1 = arith.constant 0 : index
    %3 = vector.load %arg2[%c0, %c0_1] : memref<16x128xf32, #tpu.memory_space<vmem>>, vector<16x128xf32>
    %c0_2 = arith.constant 0 : index
    %c0_3 = arith.constant 0 : index
    %4 = vector.load %arg3[%c0_2, %c0_3] : memref<16x128xf32, #tpu.memory_space<vmem>>, vector<16x128xf32>
    %5 = arith.mulf %3, %4 : vector<16x128xf32>
    %cst = arith.constant 0.000000e+00 : f32
    %cst_4 = arith.constant 1.000000e+00 : f32
    %6 = vector.broadcast %cst : f32 to vector<16x128xf32>
    %7 = arith.maximumf %6, %5 : vector<16x128xf32>
    %8 = vector.broadcast %cst_4 : f32 to vector<16x128xf32>
    %9 = arith.minimumf %8, %7 : vector<16x128xf32>
    %10 = math.roundeven %9 : vector<16x128xf32>
    %cst_5 = arith.constant 0.000000e+00 : f32
    %cst_6 = arith.constant 1.000000e+00 : f32
    %11 = vector.broadcast %cst_5 : f32 to vector<16x128xf32>
    %12 = arith.maximumf %11, %4 : vector<16x128xf32>
    %13 = vector.broadcast %cst_6 : f32 to vector<16x128xf32>
    %14 = arith.minimumf %13, %12 : vector<16x128xf32>
    %15 = math.roundeven %14 : vector<16x128xf32>
    %c0_7 = arith.constant 0 : index
    %c0_8 = arith.constant 0 : index
    %16 = vector.load %arg5[%c0_7, %c0_8] : memref<1x128xf32, #tpu.memory_space<vmem>>, vector<1x128xf32>
    %cst_9 = arith.constant dense<0.000000e+00> : vector<128xf32>
    %17 = vector.multi_reduction <add>, %10, %cst_9 [0] : vector<16x128xf32> to vector<128xf32>
    %18 = vector.shape_cast %17 : vector<128xf32> to vector<1x128xf32>
    %19 = arith.addf %16, %18 : vector<1x128xf32>
    %c0_10 = arith.constant 0 : index
    %c0_11 = arith.constant 0 : index
    %20 = vector.load %arg5[%c0_10, %c0_11] : memref<1x128xf32, #tpu.memory_space<vmem>>, vector<1x128xf32>
    tpu.vector_store %arg5[%c0_10, %c0_11], %19 {strides = array<i32>} : memref<1x128xf32, #tpu.memory_space<vmem>>, vector<1x128xf32>,
    %c0_12 = arith.constant 0 : index
    %c0_13 = arith.constant 0 : index
    %21 = vector.load %arg6[%c0_12, %c0_13] : memref<1x128xf32, #tpu.memory_space<vmem>>, vector<1x128xf32>
    %cst_14 = arith.constant dense<0.000000e+00> : vector<128xf32>
    %22 = vector.multi_reduction <add>, %15, %cst_14 [0] : vector<16x128xf32> to vector<128xf32>
    %23 = vector.shape_cast %22 : vector<128xf32> to vector<1x128xf32>
    %24 = arith.addf %21, %23 : vector<1x128xf32>
    %c0_15 = arith.constant 0 : index
    %c0_16 = arith.constant 0 : index
    %25 = vector.load %arg6[%c0_15, %c0_16] : memref<1x128xf32, #tpu.memory_space<vmem>>, vector<1x128xf32>
    tpu.vector_store %arg6[%c0_15, %c0_16], %24 {strides = array<i32>} : memref<1x128xf32, #tpu.memory_space<vmem>>, vector<1x128xf32>,
    %c0_i32_17 = arith.constant 0 : i32
    %26 = arith.cmpi eq, %arg1, %c0_i32_17 : i32
    %27 = arith.extui %26 : i1 to i32
    %c0_i32_18 = arith.constant 0 : i32
    %28 = arith.cmpi ne, %27, %c0_i32_18 : i32
    scf.if %28 {
      %c0_19 = arith.constant 0 : index
      %c0_20 = arith.constant 0 : index
      %29 = vector.load %arg5[%c0_19, %c0_20] : memref<1x128xf32, #tpu.memory_space<vmem>>, vector<1x128xf32>
      %30 = vector.shape_cast %29 : vector<1x128xf32> to vector<128xf32>
      %c0_21 = arith.constant 0 : index
      %c0_22 = arith.constant 0 : index
      %c0_23 = arith.constant 0 : index
      %31 = vector.load %arg4[%c0_21, %c0_22, %c0_23] : memref<1x2x128xf32, #tpu.memory_space<vmem>>, vector<1x1x128xf32>
      %32 = vector.shape_cast %31 : vector<1x1x128xf32> to vector<128xf32>
      %33 = vector.shape_cast %30 : vector<128xf32> to vector<1x1x128xf32>
      tpu.vector_store %arg4[%c0_21, %c0_22, %c0_23], %33 {strides = array<i32>} : memref<1x2x128xf32, #tpu.memory_space<vmem>>, vector<1x1x128xf32>,
      %c0_24 = arith.constant 0 : index
      %c0_25 = arith.constant 0 : index
      %34 = vector.load %arg6[%c0_24, %c0_25] : memref<1x128xf32, #tpu.memory_space<vmem>>, vector<1x128xf32>
      %35 = vector.shape_cast %34 : vector<1x128xf32> to vector<128xf32>
      %c0_26 = arith.constant 0 : index
      %c1 = arith.constant 1 : index
      %c0_27 = arith.constant 0 : index
      %36 = vector.load %arg4[%c0_26, %c1, %c0_27] : memref<1x2x128xf32, #tpu.memory_space<vmem>>, vector<1x1x128xf32>
      %37 = vector.shape_cast %36 : vector<1x1x128xf32> to vector<128xf32>
      %38 = vector.shape_cast %35 : vector<128xf32> to vector<1x1x128xf32>
      tpu.vector_store %arg4[%c0_26, %c1, %c0_27], %38 {strides = array<i32>} : memref<1x2x128xf32, #tpu.memory_space<vmem>>, vector<1x1x128xf32>,
    } else {
    }
    return
  }
  func.func @transform_0(%arg0: i32, %arg1: i32) -> (i32, i32) {
    %c1_i32 = arith.constant 1 : i32
    %0 = arith.muli %arg0, %c1_i32 : i32
    %1 = arith.addi %0, %arg1 : i32
    %c0_i32 = arith.constant 0 : i32
    %2 = arith.minsi %1, %c0_i32 : i32
    %c0_i32_0 = arith.constant 0 : i32
    %c0_i32_1 = arith.constant 0 : i32
    return %2, %c0_i32_0 : i32, i32
  }
  func.func @transform_1(%arg0: i32, %arg1: i32) -> (i32, i32) {
    %c1_i32 = arith.constant 1 : i32
    %0 = arith.muli %arg0, %c1_i32 : i32
    %1 = arith.addi %0, %arg1 : i32
    %c0_i32 = arith.constant 0 : i32
    %2 = arith.minsi %1, %c0_i32 : i32
    %c0_i32_0 = arith.constant 0 : i32
    %c0_i32_1 = arith.constant 0 : i32
    return %2, %c0_i32_0 : i32, i32
  }
  func.func @transform_2(%arg0: i32, %arg1: i32) -> (i32, i32, i32) {
    %c0_i32 = arith.constant 0 : i32
    %c0_i32_0 = arith.constant 0 : i32
    %c0_i32_1 = arith.constant 0 : i32
    return %arg0, %c0_i32, %c0_i32_0 : i32, i32, i32
  }
}

</mosaic_0001>

<llo_original>
// kernel: tpu_custom_call.1
$region0: #{tpu_custom_call.1}
  #allocation0 [shape = 'u32[]', space=smem, size = 0x4, offset = 0x4, fixed_abs, tag = 'smem constant byte address 0x4 - core index']
  #allocation1 [shape = 'u32[144,128]{1,0:T(1,128)}', space=vmem, size = 0x12000, scoped, tag = 'internal scratch']
  #allocation2 [shape = 'f32[1,128]{1,0:T(1,128)}', space=vmem, size = 0x200, scoped, tag = 'scratch operand']
  #allocation3 [shape = 'f32[1,128]{1,0:T(1,128)}', space=vmem, size = 0x200, scoped, tag = 'scratch operand']
  %s0 = inlined_call_operand.hbm [shape: f32[16,128], index: 0, kind: input, shape index: {}]
  %s1 = inlined_call_operand.hbm [shape: f32[16,128], index: 1, kind: input, shape index: {}]
  %s2 = inlined_call_operand.hbm [shape: f32[1,2,128], index: 2, kind: output, shape index: {}]
  %s3 = sld [smem:[#allocation0]]
  $region34: #{tpu_custom_call.1} parent=0
    _
  %s5 = ssub.s32 1, %s3
  %s6 = scalar_select 0, %s5, %s3
  $region1: #{tpu_custom_call.1} parent=0
    #allocation4 [shape = 'u8[8192]{0}', space=vmem, size = 0x2000, scoped, tag = 'input window, operand 0, single buffered']
    #allocation5 [shape = 's32[1]{0}', space=sflag, size = 0x4, scoped, tag = 'scoped memory for tpu_custom_call.1']
    #allocation6 [shape = 's32[1]{0}', space=sflag, size = 0x4, scoped, tag = 'scoped memory for tpu_custom_call.1']
    #allocation7 [shape = 'u8[8192]{0}', space=vmem, size = 0x2000, scoped, tag = 'input window, operand 1, single buffered']
    #allocation8 [shape = 's32[1]{0}', space=sflag, size = 0x4, scoped, tag = 'scoped memory for tpu_custom_call.1']
    #allocation9 [shape = 'u8[1024]{0}', space=vmem, size = 0x400, scoped, tag = 'output window, operand 0, single buffered']
    %7 = vsyncpa [#allocation5], 0
    %8 = vsyncpa [#allocation8], 0
    %9 = vsyncpa [#allocation6], 0
    // Predicated region
    $region2: #{tpu_custom_call.1} parent=1 // pred_check
      _
    $region3: #{tpu_custom_call.1} parent=1 // pred_check_branch
      %11 = sbr.rel (0) target = $region5
    $region4: #{tpu_custom_call.1} parent=1 // pred_region
      %s12 = sadd.s32 0, 0
      %p13 = scmp.lt.s32.totalorder %s12, 0
      %s14 = scalar_select %p13, %s12, 0
      %s15 = smul.u32 2, %s14
      %s17 = ssub.s32 256, 256
      %18 = vsyncadd [#allocation5], %s17
      %s19 = smul.addr %s15, 128
      %s20 = scalar_lea.hbm %s0, %s19
      %s21 = sshll.u32 [#allocation4], 4
      %s22 = int_to_ptr.vmem [resolvable:$true] %s21
      %27 = dma.hbm_to_vmem [thread:$0]  %s20, 256, %s22, [#allocation5], 128, 128, 8
    $region5: #{tpu_custom_call.1} parent=1 // pred_fallthru
      _
    // Predicated region
    $region6: #{tpu_custom_call.1} parent=1 // pred_check
      _
    $region7: #{tpu_custom_call.1} parent=1 // pred_check_branch
      %29 = sbr.rel (0) target = $region9
    $region8: #{tpu_custom_call.1} parent=1 // pred_region
      %s30 = sadd.s32 0, 0
      %p31 = scmp.lt.s32.totalorder %s30, 0
      %s32 = scalar_select %p31, %s30, 0
      %s33 = smul.u32 2, %s32
      %s35 = ssub.s32 256, 256
      %36 = vsyncadd [#allocation8], %s35
      %s37 = smul.addr %s33, 128
      %s38 = scalar_lea.hbm %s1, %s37
      %s39 = sshll.u32 [#allocation7], 4
      %s40 = int_to_ptr.vmem [resolvable:$true] %s39
      %45 = dma.hbm_to_vmem [thread:$0]  %s38, 256, %s40, [#allocation8], 128, 128, 8
    $region9: #{tpu_custom_call.1} parent=1 // pred_fallthru
      _
    // Predicated region
    $region10: #{tpu_custom_call.1} parent=1 // pred_check
      _
    $region11: #{tpu_custom_call.1} parent=1 // pred_check_branch
      %47 = sbr.rel (0) target = $region13
    $region12: #{tpu_custom_call.1} parent=1 // pred_region
      %48 = dma.done [#allocation5], 256
    $region13: #{tpu_custom_call.1} parent=1 // pred_fallthru
      _
    // Predicated region
    $region14: #{tpu_custom_call.1} parent=1 // pred_check
      _
    $region15: #{tpu_custom_call.1} parent=1 // pred_check_branch
      %50 = sbr.rel (0) target = $region17
    $region16: #{tpu_custom_call.1} parent=1 // pred_region
      %51 = dma.done [#allocation8], 256
    $region17: #{tpu_custom_call.1} parent=1 // pred_fallthru
      _
    %s52 = sadd.s32 0, 0
    %p53 = scmp.lt.s32.totalorder %s52, 0
    %s54 = scalar_select %p53, %s52, 0
    %s55 = smul.u32 2, %s54
    %s56 = sadd.s32 0, 0
    %p57 = scmp.lt.s32.totalorder %s56, 0
    %s58 = scalar_select %p57, %s56, 0
    %s59 = smul.u32 2, %s58
    %p60 = scmp.eq.s32.totalorder 0, 0
    // Predicated region
    $region18: #{tpu_custom_call.1} parent=1 // pred_check
      %p61 = pneg %p60
    $region19: #{tpu_custom_call.1} parent=1 // pred_check_branch
      %63 = sbr.rel (%p61) target = $region21
    $region20: #{tpu_custom_call.1} parent=1 // pred_region
      %64 = vst [vmem:[#allocation2] sm:$0x1] 0.0
      %65 = vst [vmem:[#allocation3] sm:$0x1] 0.0
    $region21: #{tpu_custom_call.1} parent=1 // pred_fallthru
      _
    %v66 = vld [vmem:[#allocation4] sm:$0xff]
    %v67 = vld [vmem:[#allocation4 + $0x8] sm:$0xff]
    %v68 = vld [vmem:[#allocation7] sm:$0xff]
    %v69 = vld [vmem:[#allocation7 + $0x8] sm:$0xff]
    %v70 = vmul.f32 %v66, %v68
    %v71 = vmul.f32 %v67, %v69
    %v72 = vmax.f32 %v70, 0.0
    %v73 = vmax.f32 %v71, 0.0
    %v74 = vmin.f32 %v72, 1.0
    %v75 = vmin.f32 %v73, 1.0
    %v76 = vround.ne.pseudo %v74
    %v77 = vround.ne.pseudo %v75
    %v78 = vmax.f32 %v68, 0.0
    %v79 = vmax.f32 %v69, 0.0
    %v80 = vmin.f32 %v78, 1.0
    %v81 = vmin.f32 %v79, 1.0
    %v82 = vround.ne.pseudo %v80
    %v83 = vround.ne.pseudo %v81
    %v84 = vld [vmem:[#allocation2] sm:$0x1]
    %v85 = vadd.f32 %v76, %v77
    %v86 = vrot.slane %v85, 4
    %v87 = vadd.f32 %v85, %v86
    %v88 = vrot.slane %v87, 2
    %v89 = vadd.f32 %v87, %v88
    %v90 = vrot.slane %v89, 1
    %v91 = vadd.f32 %v89, %v90
    %v92 = vadd.f32 %v84, %v91
    %93 = vst [vmem:[#allocation2] sm:$0x1] %v92
    %v94 = vld [vmem:[#allocation3] sm:$0x1]
    %v95 = vadd.f32 %v82, %v83
    %v96 = vrot.slane %v95, 4
    %v97 = vadd.f32 %v95, %v96
    %v98 = vrot.slane %v97, 2
    %v99 = vadd.f32 %v97, %v98
    %v100 = vrot.slane %v99, 1
    %v101 = vadd.f32 %v99, %v100
    %v102 = vadd.f32 %v94, %v101
    %103 = vst [vmem:[#allocation3] sm:$0x1] %v102
    // Predicated region
    $region22: #{tpu_custom_call.1} parent=1 // pred_check
      %p104 = pneg %p60
    $region23: #{tpu_custom_call.1} parent=1 // pred_check_branch
      %106 = sbr.rel (%p104) target = $region25
    $region24: #{tpu_custom_call.1} parent=1 // pred_region
      %v107 = vld [vmem:[#allocation2] sm:$0x1]
      %108 = vst [vmem:[#allocation9] sm:$0x1] %v107
      %v109 = vld [vmem:[#allocation3] sm:$0x1]
      %110 = vst [vmem:[#allocation9 + $0x1] sm:$0x1] %v109
    $region25: #{tpu_custom_call.1} parent=1 // pred_fallthru
      _
    // Predicated region
    $region26: #{tpu_custom_call.1} parent=1 // pred_check
      _
    $region27: #{tpu_custom_call.1} parent=1 // pred_check_branch
      %112 = sbr.rel (0) target = $region29
    $region28: #{tpu_custom_call.1} parent=1 // pred_region
      %s114 = ssub.s32 32, 32
      %115 = vsyncadd [#allocation6], %s114
      %s117 = sshll.u32 [#allocation9], 4
      %s118 = int_to_ptr.vmem [resolvable:$true] %s117
      %120 = dma.vmem_to_hbm [thread:$0]  %s118, 32, %s2, [#allocation6]
    $region29: #{tpu_custom_call.1} parent=1 // pred_fallthru
      _
    // Predicated region
    $region30: #{tpu_custom_call.1} parent=1 // pred_check
      _
    $region31: #{tpu_custom_call.1} parent=1 // pred_check_branch
      %122 = sbr.rel (0) target = $region33
    $region32: #{tpu_custom_call.1} parent=1 // pred_region
      %123 = dma.done [#allocation6], 32
    $region33: #{tpu_custom_call.1} parent=1 // pred_fallthru
      _
    %124 = vsyncpa [#allocation5], 1
    %125 = vsyncpa [#allocation8], 1
    %126 = vsyncpa [#allocation6], 1

</llo_original>
